<compile_context>
chip_gen: v7x
topology: tpu7x:2x2x1
jax: 0.10.0
libtpu: 0.0.40
codegen_flags: <defaults>
</compile_context>

<pallas_src>
import numpy as np
import jax
import jax.numpy as jnp
from jax.experimental import pallas as pl
from jax.experimental.pallas import tpu as pltpu


def _downsample_kernel(x_ref, w_ref, b_ref, o_ref):
    # x_ref: (1, T, Wo+1, K)    row-im2col input tile, K = 8*Cin (compute dtype)
    # w_ref: (2*K, Coutp)       packed weight panel (resident across the grid)
    # b_ref: (1, Coutp)         f32 bias
    # o_ref: (1, T, Wo, Coutp)  NHWC output tile
    T = o_ref.shape[1]
    Wo = o_ref.shape[2]
    Coutp = o_ref.shape[3]
    K = x_ref.shape[3]

    left = x_ref[0, :, 0:Wo, :].reshape(T * Wo, K)         # dw = 0 taps
    right = x_ref[0, :, 1:Wo + 1, :].reshape(T * Wo, K)    # dw = 1 taps

    if K >= 128:
        # Two accumulating MXU dots — avoids materializing a (T*Wo, 2K) concat
        # copy in VMEM and the reshape across (8,128) tile boundaries.
        acc = jnp.dot(left, w_ref[0:K, :], preferred_element_type=jnp.float32)
        acc = acc + jnp.dot(right, w_ref[K:2 * K, :],
                            preferred_element_type=jnp.float32)
    else:
        # Tiny K: one big-K matmul beats two skinny ones.
        patch = jnp.concatenate([left, right], axis=-1)     # (T*Wo, 2K)
        acc = jnp.dot(patch, w_ref[...], preferred_element_type=jnp.float32)

    acc = acc + b_ref[...]                                   # single f32 bias add
    o_ref[...] = acc.reshape(1, T, Wo, Coutp).astype(o_ref.dtype)


def downsample(x_nchw, weight, bias, *, compute_dtype=jnp.bfloat16,
               channels_last_out=False):
    """Conv2d(in_ch, out_ch, 4, 2, 1) forward.

    x_nchw: (N, Cin, H, W)   weight: (Cout, Cin, 4, 4)   bias: (Cout,)
    returns: (N, Cout, H//2, W//2)  (or NHWC if channels_last_out=True)
    """
    N, Cin, H, W = x_nchw.shape
    Cout = int(weight.shape[0])
    Ho = (H + 2 - 4) // 2 + 1
    Wo = (W + 2 - 4) // 2 + 1
    K = 8 * Cin

    cd = jnp.dtype(compute_dtype)
    out_dtype = x_nchw.dtype
    in_b = cd.itemsize
    out_b = jnp.dtype(out_dtype).itemsize

    # Lane-pad Cout to a multiple of 128 only when it is already >= 128
    # (cheap rounding -> unmasked vst). For small layers padding 8 -> 128
    # would multiply output HBM bytes, so keep the native width.
    Coutp = (-(-Cout // 128) * 128) if Cout >= 128 else Cout

    # ---- host prep (one fused XLA pass, no 2x-input-sized relayout) ----
    xc = x_nchw.astype(cd)
    xp = jnp.pad(xc, ((0, 0), (0, 0), (1, 1), (1, 1)))        # (N,Cin,H+2,W+2)
    xph = jnp.transpose(xp, (0, 2, 3, 1))                     # (N,H+2,W+2,Cin)
    slabs = []
    for b in range(2):                 # tap index = b*4 + kh
        for kh in range(4):
            slabs.append(xph[:, kh:kh + 2 * Ho - 1:2, b:b + 2 * Wo + 1:2, :])
    xr = jnp.stack(slabs, axis=-1)                            # (N,Ho,Wo+1,Cin,8)
    xr = xr.reshape(N, Ho, Wo + 1, K)        # channel = ci*8 + (b*4 + kh)

    # ---- weight panel: (Cout,Cin,4,4) -> (2K, Coutp), ci-major row order ----
    # row = dw*8*Cin + ci*8 + b*4 + kh   with kw = 2*dw + b  (matches xr packing)
    w5 = jnp.asarray(weight, cd).reshape(Cout, Cin, 4, 2, 2)  # (co,ci,kh,dw,b)
    wbig = jnp.transpose(w5, (3, 1, 4, 2, 0)).reshape(2 * K, Cout)
    b2 = jnp.asarray(bias, jnp.float32).reshape(1, Cout)
    if Coutp != Cout:
        wbig = jnp.pad(wbig, ((0, 0), (0, Coutp - Cout)))
        b2 = jnp.pad(b2, ((0, 0), (0, Coutp - Cout)))

    # ---- VMEM-aware spatial tile (per-generation budget) ----
    try:
        vmem_cap = int(getattr(pltpu.get_tpu_info(), "vmem_capacity_bytes",
                               64 << 20))
    except Exception:
        vmem_cap = 64 << 20                  # conservative (v7x per-TC)
    vmem_limit = max(32 << 20, min(vmem_cap * 3 // 4, 96 << 20))
    vmem_budget = int(vmem_limit * 0.7)      # headroom for Mosaic scratch

    per_row = (2 * (Wo + 1) * K * in_b       # input block, double buffered
               + 2 * Wo * Coutp * out_b      # output block, double buffered
               + Wo * Coutp * 4              # f32 accumulator
               + 2 * Wo * K * in_b)          # left/right (or concat) copies
    fixed = 2 * (2 * K) * Coutp * in_b + 2 * Coutp * 4   # weight panel + bias
    tile = int(max(1, min(Ho, (vmem_budget - fixed) // max(per_row, 1))))

    # >= 2 grid steps so both v7x TensorCores get work (megacore sharding).
    if N * (-(-Ho // tile)) < 2 and Ho > 1:
        tile = -(-Ho // 2)
    # Prefer tile*Wo to be a multiple of 8 sublanes (full MXU passes / stores).
    if Wo % 8 and (tile * Wo) % 8:
        for t in range(tile, 0, -1):
            if (t * Wo) % 8 == 0:
                tile = t
                break

    n_tiles = -(-Ho // tile)
    Ho_pad = n_tiles * tile
    if Ho_pad != Ho:
        xr = jnp.pad(xr, ((0, 0), (0, Ho_pad - Ho), (0, 0), (0, 0)))

    flops = 2 * N * Ho * Wo * (2 * K) * Coutp
    bytes_accessed = (xr.size * in_b + wbig.size * in_b + b2.size * 4
                      + N * Ho_pad * Wo * Coutp * out_b)

    def _call(buffered_weights):
        w_kwargs = {}
        if buffered_weights:
            # Constant index map -> a single resident buffer is enough.
            w_kwargs["pipeline_mode"] = pl.Buffered(1)
        return pl.pallas_call(
            _downsample_kernel,
            out_shape=jax.ShapeDtypeStruct((N, Ho_pad, Wo, Coutp), out_dtype),
            grid_spec=pltpu.PrefetchScalarGridSpec(
                num_scalar_prefetch=0,
                grid=(N, n_tiles),
                in_specs=[
                    pl.BlockSpec((1, tile, Wo + 1, K),
                                 lambda n, t: (n, t, 0, 0)),
                    pl.BlockSpec((2 * K, Coutp), lambda n, t: (0, 0),
                                 **w_kwargs),
                    pl.BlockSpec((1, Coutp), lambda n, t: (0, 0)),
                ],
                out_specs=pl.BlockSpec((1, tile, Wo, Coutp),
                                       lambda n, t: (n, t, 0, 0)),
            ),
            compiler_params=pltpu.CompilerParams(
                dimension_semantics=("parallel", "parallel"),
                vmem_limit_bytes=int(vmem_limit)),
            cost_estimate=pl.CostEstimate(flops=int(flops), transcendentals=0,
                                          bytes_accessed=int(bytes_accessed)),
        )(xr, wbig, b2)

    try:
        out_nhwc = _call(True)
    except Exception:
        out_nhwc = _call(False)   # pipeline_mode / Buffered(1) unsupported

    out_nhwc = out_nhwc[:, :Ho, :, :Cout]
    if channels_last_out:
        return out_nhwc            # consumer takes NHWC -> skip the relayout
    return jnp.transpose(out_nhwc, (0, 3, 1, 2))              # NHWC -> NCHW


def ref_conv2d(x, weight, bias):
    """Pure-JAX reference for PyTorch Conv2d(k=4, s=2, p=1)."""
    y = jax.lax.conv_general_dilated(
        x, weight, window_strides=(2, 2), padding=((1, 1), (1, 1)),
        dimension_numbers=('NCHW', 'OIHW', 'NCHW'))
    return y + bias.reshape(1, -1, 1, 1)


def _xavier_uniform(key, cout, cin):
    # fan_in = cin*16, fan_out = cout*16 -> bound = sqrt(6 / (16*(cin+cout)))
    bound = float(np.sqrt(6.0 / (16.0 * (cin + cout))))
    return jax.random.uniform(key, (cout, cin, 4, 4),
                              minval=-bound, maxval=bound, dtype=jnp.float32)


if __name__ == "__main__":
    key = jax.random.PRNGKey(0)

    # ---- case 1: module-faithful small shapes (bf16 path, K < 128) ----
    N, Cin, Cout, H, W = 2, 4, 8, 16, 16
    key, kx, kw = jax.random.split(key, 3)
    x = jax.random.normal(kx, (N, Cin, H, W), dtype=jnp.float32)
    weight = _xavier_uniform(kw, Cout, Cin)
    bias = jnp.zeros((Cout,), dtype=jnp.float32)          # init.zeros_(bias)

    ref = ref_conv2d(x, weight, bias)
    out = jax.block_until_ready(downsample(x, weight, bias))
    assert out.shape == (N, Cout, H // 2, W // 2), out.shape
    np.testing.assert_allclose(np.asarray(out), np.asarray(ref),
                               rtol=3e-2, atol=3e-2)       # bf16 MXU path
    out32 = jax.block_until_ready(
        downsample(x, weight, bias, compute_dtype=jnp.float32))
    np.testing.assert_allclose(np.asarray(out32), np.asarray(ref),
                               rtol=1e-4, atol=1e-4)       # f32 tight check

    # ---- case 2: wider channels -> split-dot path (K = 128), nonzero bias ----
    N2, Cin2, Cout2, H2, W2 = 1, 16, 32, 8, 8
    key, kx2, kw2, kb2 = jax.random.split(key, 4)
    x2 = jax.random.normal(kx2, (N2, Cin2, H2, W2), dtype=jnp.float32)
    weight2 = _xavier_uniform(kw2, Cout2, Cin2)
    bias2 = 0.1 * jax.random.normal(kb2, (Cout2,), dtype=jnp.float32)
    ref2 = ref_conv2d(x2, weight2, bias2)
    out2 = jax.block_until_ready(downsample(x2, weight2, bias2))
    np.testing.assert_allclose(np.asarray(out2), np.asarray(ref2),
                               rtol=3e-2, atol=3e-2)

    # ---- case 3: odd spatial size -> exercises the Ho-pad / slice path ----
    N3, Cin3, Cout3, H3, W3 = 1, 8, 8, 10, 10
    key, kx3, kw3, kb3 = jax.random.split(key, 4)
    x3 = jax.random.normal(kx3, (N3, Cin3, H3, W3), dtype=jnp.float32)
    weight3 = _xavier_uniform(kw3, Cout3, Cin3)
    bias3 = 0.1 * jax.random.normal(kb3, (Cout3,), dtype=jnp.float32)
    ref3 = ref_conv2d(x3, weight3, bias3)
    out3 = jax.block_until_ready(downsample(x3, weight3, bias3))
    assert out3.shape == (N3, Cout3, H3 // 2, W3 // 2), out3.shape
    np.testing.assert_allclose(np.asarray(out3), np.asarray(ref3),
                               rtol=3e-2, atol=3e-2)

    print("KERNEL_OK")
</pallas_src>

<mosaic_0001>
module attributes {stable_mosaic.version = 11 : i64} {
  func.func @_downsample_kernel(%arg0: i32, %arg1: i32, %arg2: memref<1x8x9x32xbf16, #tpu.memory_space<vmem>>, %arg3: memref<64x8xbf16, #tpu.memory_space<vmem>>, %arg4: memref<1x8xf32, #tpu.memory_space<vmem>>, %arg5: memref<1x8x8x8xf32, #tpu.memory_space<vmem>>) attributes {dimension_semantics = [#tpu.dimension_semantics<parallel>, #tpu.dimension_semantics<parallel>], iteration_bounds = array<i64: 2, 1>, scalar_prefetch = 0 : i64, scratch_operands = 0 : i64, tpu.core_type = #tpu.core_type<tc>, window_params = [{transform_indices = @transform_0, window_bounds = array<i64: 1, 8, 9, 32>}, {pipeline_mode = #tpu.pipeline_mode<synchronous>, transform_indices = @transform_1, window_bounds = array<i64: 64, 8>}, {pipeline_mode = #tpu.pipeline_mode<synchronous>, transform_indices = @transform_2, window_bounds = array<i64: 1, 8>}, {transform_indices = @transform_3, window_bounds = array<i64: 1, 8, 8, 8>}]} {
    %c0 = arith.constant 0 : index
    %c0_0 = arith.constant 0 : index
    %c0_1 = arith.constant 0 : index
    %c0_2 = arith.constant 0 : index
    %0 = vector.load %arg2[%c0, %c0_0, %c0_1, %c0_2] : memref<1x8x9x32xbf16, #tpu.memory_space<vmem>>, vector<1x8x8x32xbf16>
    %1 = vector.shape_cast %0 : vector<1x8x8x32xbf16> to vector<8x8x32xbf16>
    %2 = vector.shape_cast %1 : vector<8x8x32xbf16> to vector<64x32xbf16>
    %c0_3 = arith.constant 0 : index
    %c0_4 = arith.constant 0 : index
    %c1 = arith.constant 1 : index
    %c0_5 = arith.constant 0 : index
    %3 = vector.load %arg2[%c0_3, %c0_4, %c1, %c0_5] : memref<1x8x9x32xbf16, #tpu.memory_space<vmem>>, vector<1x8x8x32xbf16>
    %4 = vector.shape_cast %3 : vector<1x8x8x32xbf16> to vector<8x8x32xbf16>
    %5 = vector.shape_cast %4 : vector<8x8x32xbf16> to vector<64x32xbf16>
    %6 = tpu.concatenate %2, %5 in 1 : vector<64x32xbf16>, vector<64x32xbf16> -> vector<64x64xbf16>
    %c0_6 = arith.constant 0 : index
    %c0_7 = arith.constant 0 : index
    %7 = vector.load %arg3[%c0_6, %c0_7] : memref<64x8xbf16, #tpu.memory_space<vmem>>, vector<64x8xbf16>
    %cst = arith.constant dense<0.000000e+00> : vector<64x8xf32>
    %8 = tpu.matmul %6, %7, %cst {dimension_numbers = #tpu.dot_dimension_numbers<[1], [0], [0], [1], [0, 0, 1, 1], [], []>} : vector<64x64xbf16>, vector<64x8xbf16>, vector<64x8xf32> -> vector<64x8xf32>
    %c0_8 = arith.constant 0 : index
    %c0_9 = arith.constant 0 : index
    %9 = vector.load %arg4[%c0_8, %c0_9] : memref<1x8xf32, #tpu.memory_space<vmem>>, vector<1x8xf32>
    %10 = vector.broadcast %9 : vector<1x8xf32> to vector<64x8xf32>
    %11 = arith.addf %8, %10 : vector<64x8xf32>
    %12 = vector.shape_cast %11 : vector<64x8xf32> to vector<1x8x8x8xf32>
    %c0_10 = arith.constant 0 : index
    %c0_11 = arith.constant 0 : index
    %c0_12 = arith.constant 0 : index
    %c0_13 = arith.constant 0 : index
    %13 = vector.load %arg5[%c0_10, %c0_11, %c0_12, %c0_13] : memref<1x8x8x8xf32, #tpu.memory_space<vmem>>, vector<1x8x8x8xf32>
    tpu.vector_store %arg5[%c0_10, %c0_11, %c0_12, %c0_13], %12 {strides = array<i32>} : memref<1x8x8x8xf32, #tpu.memory_space<vmem>>, vector<1x8x8x8xf32>,
    return
  }
  func.func @transform_0(%arg0: i32, %arg1: i32) -> (i32, i32, i32, i32) {
    %c0_i32 = arith.constant 0 : i32
    %c0_i32_0 = arith.constant 0 : i32
    %c0_i32_1 = arith.constant 0 : i32
    return %arg0, %arg1, %c0_i32, %c0_i32_0 : i32, i32, i32, i32
  }
  func.func @transform_1(%arg0: i32, %arg1: i32) -> (i32, i32) {
    %c0_i32 = arith.constant 0 : i32
    %c0_i32_0 = arith.constant 0 : i32
    %c0_i32_1 = arith.constant 0 : i32
    return %c0_i32, %c0_i32_0 : i32, i32
  }
  func.func @transform_2(%arg0: i32, %arg1: i32) -> (i32, i32) {
    %c0_i32 = arith.constant 0 : i32
    %c0_i32_0 = arith.constant 0 : i32
    %c0_i32_1 = arith.constant 0 : i32
    return %c0_i32, %c0_i32_0 : i32, i32
  }
  func.func @transform_3(%arg0: i32, %arg1: i32) -> (i32, i32, i32, i32) {
    %c0_i32 = arith.constant 0 : i32
    %c0_i32_0 = arith.constant 0 : i32
    %c0_i32_1 = arith.constant 0 : i32
    return %arg0, %arg1, %c0_i32, %c0_i32_0 : i32, i32, i32, i32
  }
}

module attributes {stable_mosaic.version = 11 : i64} {
  func.func @_downsample_kernel(%arg0: i32, %arg1: i32, %arg2: memref<1x8x9x32xbf16, #tpu.memory_space<vmem>>, %arg3: memref<64x8xbf16, #tpu.memory_space<vmem>>, %arg4: memref<1x8xf32, #tpu.memory_space<vmem>>, %arg5: memref<1x8x8x8xf32, #tpu.memory_space<vmem>>) attributes {dimension_semantics = [#tpu.dimension_semantics<parallel>, #tpu.dimension_semantics<parallel>], iteration_bounds = array<i64: 2, 1>, scalar_prefetch = 0 : i64, scratch_operands = 0 : i64, tpu.core_type = #tpu.core_type<tc>, window_params = [{transform_indices = @transform_0, window_bounds = array<i64: 1, 8, 9, 32>}, {pipeline_mode = #tpu.pipeline_mode<synchronous>, transform_indices = @transform_1, window_bounds = array<i64: 64, 8>}, {pipeline_mode = #tpu.pipeline_mode<synchronous>, transform_indices = @transform_2, window_bounds = array<i64: 1, 8>}, {transform_indices = @transform_3, window_bounds = array<i64: 1, 8, 8, 8>}]} {
    %c0 = arith.constant 0 : index
    %c0_0 = arith.constant 0 : index
    %c0_1 = arith.constant 0 : index
    %c0_2 = arith.constant 0 : index
    %0 = vector.load %arg2[%c0, %c0_0, %c0_1, %c0_2] : memref<1x8x9x32xbf16, #tpu.memory_space<vmem>>, vector<1x8x8x32xbf16>
    %1 = vector.shape_cast %0 : vector<1x8x8x32xbf16> to vector<8x8x32xbf16>
    %2 = vector.shape_cast %1 : vector<8x8x32xbf16> to vector<64x32xbf16>
    %c0_3 = arith.constant 0 : index
    %c0_4 = arith.constant 0 : index
    %c1 = arith.constant 1 : index
    %c0_5 = arith.constant 0 : index
    %3 = vector.load %arg2[%c0_3, %c0_4, %c1, %c0_5] : memref<1x8x9x32xbf16, #tpu.memory_space<vmem>>, vector<1x8x8x32xbf16>
    %4 = vector.shape_cast %3 : vector<1x8x8x32xbf16> to vector<8x8x32xbf16>
    %5 = vector.shape_cast %4 : vector<8x8x32xbf16> to vector<64x32xbf16>
    %6 = tpu.concatenate %2, %5 in 1 : vector<64x32xbf16>, vector<64x32xbf16> -> vector<64x64xbf16>
    %c0_6 = arith.constant 0 : index
    %c0_7 = arith.constant 0 : index
    %7 = vector.load %arg3[%c0_6, %c0_7] : memref<64x8xbf16, #tpu.memory_space<vmem>>, vector<64x8xbf16>
    %cst = arith.constant dense<0.000000e+00> : vector<64x8xf32>
    %8 = tpu.matmul %6, %7, %cst {dimension_numbers = #tpu.dot_dimension_numbers<[1], [0], [0], [1], [0, 0, 1, 1], [], []>} : vector<64x64xbf16>, vector<64x8xbf16>, vector<64x8xf32> -> vector<64x8xf32>
    %c0_8 = arith.constant 0 : index
    %c0_9 = arith.constant 0 : index
    %9 = vector.load %arg4[%c0_8, %c0_9] : memref<1x8xf32, #tpu.memory_space<vmem>>, vector<1x8xf32>
    %10 = vector.broadcast %9 : vector<1x8xf32> to vector<64x8xf32>
    %11 = arith.addf %8, %10 : vector<64x8xf32>
    %12 = vector.shape_cast %11 : vector<64x8xf32> to vector<1x8x8x8xf32>
    %c0_10 = arith.constant 0 : index
    %c0_11 = arith.constant 0 : index
    %c0_12 = arith.constant 0 : index
    %c0_13 = arith.constant 0 : index
    %13 = vector.load %arg5[%c0_10, %c0_11, %c0_12, %c0_13] : memref<1x8x8x8xf32, #tpu.memory_space<vmem>>, vector<1x8x8x8xf32>
    tpu.vector_store %arg5[%c0_10, %c0_11, %c0_12, %c0_13], %12 {strides = array<i32>} : memref<1x8x8x8xf32, #tpu.memory_space<vmem>>, vector<1x8x8x8xf32>,
    return
  }
  func.func @transform_0(%arg0: i32, %arg1: i32) -> (i32, i32, i32, i32) {
    %c0_i32 = arith.constant 0 : i32
    %c0_i32_0 = arith.constant 0 : i32
    %c0_i32_1 = arith.constant 0 : i32
    return %arg0, %arg1, %c0_i32, %c0_i32_0 : i32, i32, i32, i32
  }
  func.func @transform_1(%arg0: i32, %arg1: i32) -> (i32, i32) {
    %c0_i32 = arith.constant 0 : i32
    %c0_i32_0 = arith.constant 0 : i32
    %c0_i32_1 = arith.constant 0 : i32
    return %c0_i32, %c0_i32_0 : i32, i32
  }
  func.func @transform_2(%arg0: i32, %arg1: i32) -> (i32, i32) {
    %c0_i32 = arith.constant 0 : i32
    %c0_i32_0 = arith.constant 0 : i32
    %c0_i32_1 = arith.constant 0 : i32
    return %c0_i32, %c0_i32_0 : i32, i32
  }
  func.func @transform_3(%arg0: i32, %arg1: i32) -> (i32, i32, i32, i32) {
    %c0_i32 = arith.constant 0 : i32
    %c0_i32_0 = arith.constant 0 : i32
    %c0_i32_1 = arith.constant 0 : i32
    return %arg0, %arg1, %c0_i32, %c0_i32_0 : i32, i32, i32, i32
  }
}

</mosaic_0001>

<llo_original>
// kernel: tpu_custom_call.1
$region0: #{tpu_custom_call.1}
  #allocation0 [shape = 'u32[]', space=smem, size = 0x4, offset = 0x4, fixed_abs, tag = 'smem constant byte address 0x4 - core index']
  #allocation1 [shape = 'u32[144,128]{1,0:T(1,128)}', space=vmem, size = 0x12000, scoped, tag = 'internal scratch']
  %s0 = inlined_call_operand.vmem [shape: bf16[2,8,9,32], index: 0, kind: input, shape index: {}]
  %s1 = inlined_call_operand.vmem [shape: bf16[64,8], index: 1, kind: input, shape index: {}]
  %s2 = inlined_call_operand.vmem [shape: f32[1,8], index: 2, kind: input, shape index: {}]
  %s3 = inlined_call_operand.hbm [shape: f32[2,8,8,8], index: 3, kind: output, shape index: {}]
  %s4 = sld [smem:[#allocation0]]
  $region45: #{tpu_custom_call.1} parent=0
    _
  %s6 = ssub.s32 1, %s4
  %s7 = scalar_select 0, %s6, %s4
  $region1: #{tpu_custom_call.1} parent=0
    #allocation2 [shape = 'u8[65536]{0}', space=vmem, size = 0x10000, scoped, tag = 'output window, operand 0']
    #allocation3 [shape = 's32[2]{0}', space=sflag, size = 0x8, scoped, tag = 'scoped memory for tpu_custom_call.1']
    %8 = vsyncpa [#allocation3], 0
    %s9 = scalar_lea.sflag [#allocation3], 1
    %10 = vsyncpa %s9, 0
    loop: start=0, step=1, limit=4
    $region2: #{tpu_custom_call.1} parent=1 // loop_pre_header
      _
    $region3: #{tpu_custom_call.1} parent=1 // loop_header
      %s12 = sphi 0, %s16
      %p13 = scmp.ge.s32.totalorder %s12, 4
      %s19 = sphi 0, %s31
      %s20 = sphi 0, %s27
      %s21 = sphi 0, %s19
      %s22 = sphi 0, %s20
      %s23 = sphi 0, %s21
      %s24 = sphi 0, %s22
      %s36 = sphi 0, %s38
      %s39 = sphi 0, %s36
      %s40 = sphi 0, %s39
      %s56 = sphi 0, %s40
      %s60 = sphi 0, %s60
      %s62 = sphi 0, %s60
      %s63 = sphi 0, %s62
      %s77 = sphi 0, %s63
      %s81 = sphi 0, %s81
      %s83 = sphi 0, %s81
      %s84 = sphi 0, %s83
      %s98 = sphi 0, %s84
      %s106 = sphi 0, %s108
      %s109 = sphi 0, %s106
      %s110 = sphi 0, %s109
      %s126 = sphi 0, %s110
    $region4: #{tpu_custom_call.1} parent=1 // loop_header_branch
      %15 = sbr.rel (%p13) target = $region8
    $region5: #{tpu_custom_call.1} parent=1 // loop_body
      %s17 = ssub.s32 %s12, 1
      %s18 = ssub.s32 %s12, 2
      %s25 = sadd.s32 1, %s20
      %p26 = scmp.ge.s32.totalorder %s25, 1
      %s27 = scalar_select %p26, 0, %s25
      %s28 = sadd.s32 1, %s19
      %s29 = scalar_select %p26, %s28, %s19
      %p30 = scmp.ge.s32.totalorder %s29, 2
      %s31 = scalar_select %p30, 0, %s29
      %s32 = ssub.s32 %s19, %s31
      %s33 = ssub.s32 %s20, %s27
      %s34 = sor.u32 %s32, %s33
      %p35 = scmp.eq.s32.totalorder %s34, 0
      %s37 = sadd.s32 %s36, 1
      %s38 = scalar_select %p35, %s36, %s37
      %p41 = pneg %p35
      %p42 = scmp.eq.s32.totalorder %s12, 1
      %p43 = por %p41, %p42
      %p44 = scmp.ne.s32.totalorder %s36, %s39
      %p45 = scmp.eq.s32.totalorder %s12, 0
      %p46 = por %p44, %p45
      %p47 = scmp.ne.s32.totalorder %s36, %s39
      %p48 = scmp.eq.s32.totalorder %s17, 1
      %p49 = por %p47, %p48
      %p50 = scmp.ne.s32.totalorder %s39, %s40
      %p51 = scmp.eq.s32.totalorder %s17, 0
      %p52 = por %p50, %p51
      %p53 = scmp.ne.s32.totalorder %s39, %s40
      %p54 = scmp.eq.s32.totalorder %s18, 1
      %p55 = por %p53, %p54
      %p57 = scmp.ne.s32.totalorder %s40, %s56
      %p58 = scmp.eq.s32.totalorder %s18, 0
      %p59 = por %p57, %p58
      %s61 = sadd.s32 %s60, 1
      %p64 = scmp.eq.s32.totalorder %s12, 1
      %p65 = scmp.ne.s32.totalorder %s60, %s62
      %p66 = scmp.eq.s32.totalorder %s12, 0
      %p67 = por %p65, %p66
      %p68 = scmp.ne.s32.totalorder %s60, %s62
      %p69 = scmp.eq.s32.totalorder %s17, 1
      %p70 = por %p68, %p69
      %p71 = scmp.ne.s32.totalorder %s62, %s63
      %p72 = scmp.eq.s32.totalorder %s17, 0
      %p73 = por %p71, %p72
      %p74 = scmp.ne.s32.totalorder %s62, %s63
      %p75 = scmp.eq.s32.totalorder %s18, 1
      %p76 = por %p74, %p75
      %p78 = scmp.ne.s32.totalorder %s63, %s77
      %p79 = scmp.eq.s32.totalorder %s18, 0
      %p80 = por %p78, %p79
      %s82 = sadd.s32 %s81, 1
      %p85 = scmp.eq.s32.totalorder %s12, 1
      %p86 = scmp.ne.s32.totalorder %s81, %s83
      %p87 = scmp.eq.s32.totalorder %s12, 0
      %p88 = por %p86, %p87
      %p89 = scmp.ne.s32.totalorder %s81, %s83
      %p90 = scmp.eq.s32.totalorder %s17, 1
      %p91 = por %p89, %p90
      %p92 = scmp.ne.s32.totalorder %s83, %s84
      %p93 = scmp.eq.s32.totalorder %s17, 0
      %p94 = por %p92, %p93
      %p95 = scmp.ne.s32.totalorder %s83, %s84
      %p96 = scmp.eq.s32.totalorder %s18, 1
      %p97 = por %p95, %p96
      %p99 = scmp.ne.s32.totalorder %s84, %s98
      %p100 = scmp.eq.s32.totalorder %s18, 0
      %p101 = por %p99, %p100
      %s102 = ssub.s32 %s19, %s31
      %s103 = ssub.s32 %s20, %s27
      %s104 = sor.u32 %s102, %s103
      %p105 = scmp.eq.s32.totalorder %s104, 0
      %s107 = sadd.s32 %s106, 1
      %s108 = scalar_select %p105, %s106, %s107
      %p111 = pneg %p105
      %p112 = scmp.eq.s32.totalorder %s12, 1
      %p113 = por %p111, %p112
      %p114 = scmp.ne.s32.totalorder %s106, %s109
      %p115 = scmp.eq.s32.totalorder %s12, 0
      %p116 = por %p114, %p115
      %p117 = scmp.ne.s32.totalorder %s106, %s109
      %p118 = scmp.eq.s32.totalorder %s17, 1
      %p119 = por %p117, %p118
      %p120 = scmp.ne.s32.totalorder %s109, %s110
      %p121 = scmp.eq.s32.totalorder %s17, 0
      %p122 = por %p120, %p121
      %p123 = scmp.ne.s32.totalorder %s109, %s110
      %p124 = scmp.eq.s32.totalorder %s18, 1
      %p125 = por %p123, %p124
      %p127 = scmp.ne.s32.totalorder %s110, %s126
      %p128 = scmp.eq.s32.totalorder %s18, 0
      %p129 = por %p127, %p128
      %p130 = scmp.le.s32.totalorder 1, %s12
      %p131 = scmp.lt.s32.totalorder %s12, 3
      %p132 = pnand %p130, %p131
      %p133 = pneg %p132
      // Predicated region
      $region9: #{tpu_custom_call.1} parent=5 // pred_check
        _
      $region10: #{tpu_custom_call.1} parent=5 // pred_check_branch
        %135 = sbr.rel (%p132) target = $region12
      $region11: #{tpu_custom_call.1} parent=5 // pred_region
        %s136 = ssub.s32 %s12, 1
        // Predicated region
        $region13: #{tpu_custom_call.1} parent=11 // pred_check
          %p137 = pneg %p73
        $region14: #{tpu_custom_call.1} parent=11 // pred_check_branch
          %139 = sbr.rel (%p137) target = $region16
        $region15: #{tpu_custom_call.1} parent=11 // pred_region
          _
        $region16: #{tpu_custom_call.1} parent=11 // pred_fallthru
          _
        // Predicated region
        $region17: #{tpu_custom_call.1} parent=11 // pred_check
          %p140 = pneg %p94
        $region18: #{tpu_custom_call.1} parent=11 // pred_check_branch
          %142 = sbr.rel (%p140) target = $region20
        $region19: #{tpu_custom_call.1} parent=11 // pred_region
          _
        $region20: #{tpu_custom_call.1} parent=11 // pred_fallthru
          _
      $region12: #{tpu_custom_call.1} parent=5 // pred_fallthru
        _
      %p143 = scmp.lt.s32.totalorder %s12, 2
      // Predicated region
      $region21: #{tpu_custom_call.1} parent=5 // pred_check
        %p144 = pneg %p143
      $region22: #{tpu_custom_call.1} parent=5 // pred_check_branch
        %146 = sbr.rel (%p144) target = $region24
      $region23: #{tpu_custom_call.1} parent=5 // pred_region
        // Predicated region
        $region25: #{tpu_custom_call.1} parent=23 // pred_check
          %p147 = pneg %p46
        $region26: #{tpu_custom_call.1} parent=23 // pred_check_branch
          %149 = sbr.rel (%p147) target = $region28
        $region27: #{tpu_custom_call.1} parent=23 // pred_region
          %s150 = smul.u32 8, %s20
          %p151 = scmp.lt.s32.totalorder %s19, 1
          %s152 = scalar_select %p151, %s19, 1
          %p153 = scmp.lt.s32.totalorder %s150, 7
          %s154 = scalar_select %p153, %s150, 7
          %s155 = smul.addr %s154, 2
          %s156 = smul.addr %s152, 16
          %s157 = sadd.s32 %s155, %s156
          %s158 = smul.addr %s157, 4
          %s159 = scalar_lea.vmem %s0, %s158
          %s160 = smul.u32 8, %s20
        $region28: #{tpu_custom_call.1} parent=23 // pred_fallthru
          _
      $region24: #{tpu_custom_call.1} parent=5 // pred_fallthru
        _
      %p161 = scmp.le.s32.totalorder 1, %s12
      %p162 = scmp.lt.s32.totalorder %s12, 3
      %p163 = pnand %p161, %p162
      %p164 = pneg %p163
      // Predicated region
      $region29: #{tpu_custom_call.1} parent=5 // pred_check
        _
      $region30: #{tpu_custom_call.1} parent=5 // pred_check_branch
        %166 = sbr.rel (%p163) target = $region32
      $region31: #{tpu_custom_call.1} parent=5 // pred_region
        %s167 = ssub.s32 %s12, 1
        %s168 = smul.u32 8, %s22
        %p169 = scmp.lt.s32.totalorder %s21, 1
        %s170 = scalar_select %p169, %s21, 1
        %p171 = scmp.lt.s32.totalorder %s168, 7
        %s172 = scalar_select %p171, %s168, 7
        %s173 = smul.addr %s172, 2
        %s174 = smul.addr %s170, 16
        %s175 = sadd.s32 %s173, %s174
        %s176 = smul.addr %s175, 4
        %s177 = scalar_lea.vmem %s0, %s176
        %p178 = pneg %p52
        %p179 = pneg %p49
        %p180 = pneg %p73
        %p181 = pneg %p70
        %p182 = pneg %p94
        %p183 = pneg %p91
        %p184 = pneg %p122
        %p185 = pneg %p119
        %s186 = sand.u32 %s109, 1
        %s187 = scalar_lea.sflag [#allocation3], %s186
        %s188 = sand.u32 %s109, 1
        %s189 = smul.addr %s188, 64
        %s190 = scalar_lea.vmem [#allocation2], %s189
        %s191 = smul.u32 8, %s22
        %p192 = scmp.lt.s32.totalorder %s21, 1
        %s193 = scalar_select %p192, %s21, 1
        %p194 = scmp.lt.s32.totalorder %s191, 7
        %s195 = scalar_select %p194, %s191, 7
        %s196 = smul.addr %s195, 2
        %s197 = smul.addr %s193, 16
        %s198 = sadd.s32 %s196, %s197
        %s199 = smul.addr %s198, 4
        %s200 = scalar_lea.vmem %s0, %s199
        %s201 = smul.u32 8, %s22
        %s202 = smul.u32 8, %s22
        %v204 = vld [vmem:[%s200] sm:$0xf]
        %v205 = vld [vmem:[%s200 + $0x8] sm:$0xf]
        %v206 = vld [vmem:[%s200 + $0x10] sm:$0xf]
        %v207 = vld [vmem:[%s200 + $0x18] sm:$0xf]
        %v208 = vld [vmem:[%s200 + $0x20] sm:$0xf]
        %v209 = vld [vmem:[%s200 + $0x28] sm:$0xf]
        %v210 = vld [vmem:[%s200 + $0x30] sm:$0xf]
        %v211 = vld [vmem:[%s200 + $0x38] sm:$0xf]
        %v212 = vld [vmem:[%s200 + $0x4] sm:$0x1]
        %v213 = vld [vmem:[%s200 + $0xc] sm:$0x1]
        %v214 = vld [vmem:[%s200 + $0x14] sm:$0x1]
        %v215 = vld [vmem:[%s200 + $0x1c] sm:$0x1]
        %v216 = vld [vmem:[%s200 + $0x24] sm:$0x1]
        %v217 = vld [vmem:[%s200 + $0x2c] sm:$0x1]
        %v218 = vld [vmem:[%s200 + $0x34] sm:$0x1]
        %v219 = vld [vmem:[%s200 + $0x3c] sm:$0x1]
        %vm220 = vsmask.f32 3328
        %vm221 = vsmask.f32 7440
        %vm222 = vmor %vm220, %vm221
        %v224 = vshrl.u32 %v204, 16
        %v226 = vrot.slane %v224, 4
        %v227 = vshll.u32 %v204, 16
        %v229 = vrot.slane %v227, 5
        %v230 = vor.u32 %v226, %v229
        %v231 = vrot.slane %v230, 4
        %v233 = vshll.u32 %v212, 16
        %v235 = vrot.slane %v233, 5
        %v236 = vsel %vm222, %v231, %v235
        %v238 = vshrl.u32 %v205, 16
        %v240 = vrot.slane %v238, 4
        %v241 = vshll.u32 %v205, 16
        %v243 = vrot.slane %v241, 5
        %v244 = vor.u32 %v240, %v243
        %v245 = vrot.slane %v244, 4
        %v247 = vshll.u32 %v213, 16
        %v249 = vrot.slane %v247, 5
        %v250 = vsel %vm222, %v245, %v249
        %v252 = vshrl.u32 %v206, 16
        %v254 = vrot.slane %v252, 4
        %v255 = vshll.u32 %v206, 16
        %v257 = vrot.slane %v255, 5
        %v258 = vor.u32 %v254, %v257
        %v259 = vrot.slane %v258, 4
        %v261 = vshll.u32 %v214, 16
        %v263 = vrot.slane %v261, 5
        %v264 = vsel %vm222, %v259, %v263
        %v266 = vshrl.u32 %v207, 16
        %v268 = vrot.slane %v266, 4
        %v269 = vshll.u32 %v207, 16
        %v271 = vrot.slane %v269, 5
        %v272 = vor.u32 %v268, %v271
        %v273 = vrot.slane %v272, 4
        %v275 = vshll.u32 %v215, 16
        %v277 = vrot.slane %v275, 5
        %v278 = vsel %vm222, %v273, %v277
        %v280 = vshrl.u32 %v208, 16
        %v282 = vrot.slane %v280, 4
        %v283 = vshll.u32 %v208, 16
        %v285 = vrot.slane %v283, 5
        %v286 = vor.u32 %v282, %v285
        %v287 = vrot.slane %v286, 4
        %v289 = vshll.u32 %v216, 16
        %v291 = vrot.slane %v289, 5
        %v292 = vsel %vm222, %v287, %v291
        %v294 = vshrl.u32 %v209, 16
        %v296 = vrot.slane %v294, 4
        %v297 = vshll.u32 %v209, 16
        %v299 = vrot.slane %v297, 5
        %v300 = vor.u32 %v296, %v299
        %v301 = vrot.slane %v300, 4
        %v303 = vshll.u32 %v217, 16
        %v305 = vrot.slane %v303, 5
        %v306 = vsel %vm222, %v301, %v305
        %v308 = vshrl.u32 %v210, 16
        %v310 = vrot.slane %v308, 4
        %v311 = vshll.u32 %v210, 16
        %v313 = vrot.slane %v311, 5
        %v314 = vor.u32 %v310, %v313
        %v315 = vrot.slane %v314, 4
        %v317 = vshll.u32 %v218, 16
        %v319 = vrot.slane %v317, 5
        %v320 = vsel %vm222, %v315, %v319
        %v322 = vshrl.u32 %v211, 16
        %v324 = vrot.slane %v322, 4
        %v325 = vshll.u32 %v211, 16
        %v327 = vrot.slane %v325, 5
        %v328 = vor.u32 %v324, %v327
        %v329 = vrot.slane %v328, 4
        %v331 = vshll.u32 %v219, 16
        %v333 = vrot.slane %v331, 5
        %v334 = vsel %vm222, %v329, %v333
        %v343 = vunpack.c.l.b16 %v204
        %v344 = vunpack.c.l.b16 %v205
        %v345 = vunpack.c.l.b16 %v206
        %v346 = vunpack.c.l.b16 %v207
        %v347 = vunpack.c.l.b16 %v208
        %v348 = vunpack.c.l.b16 %v209
        %v349 = vunpack.c.l.b16 %v210
        %v350 = vunpack.c.l.b16 %v211
        %v351 = vpack.c.b16 %v344, %v343
        %v352 = vpack.c.b16 %v346, %v345
        %v353 = vpack.c.b16 %v348, %v347
        %v354 = vpack.c.b16 %v350, %v349
        %v355 = vunpack.c.l.b16 %v236
        %v356 = vunpack.c.l.b16 %v250
        %v357 = vunpack.c.l.b16 %v264
        %v358 = vunpack.c.l.b16 %v278
        %v359 = vunpack.c.l.b16 %v292
        %v360 = vunpack.c.l.b16 %v306
        %v361 = vunpack.c.l.b16 %v320
        %v362 = vunpack.c.l.b16 %v334
        %v363 = vpack.c.b16 %v356, %v355
        %v364 = vpack.c.b16 %v358, %v357
        %v365 = vpack.c.b16 %v360, %v359
        %v366 = vpack.c.b16 %v362, %v361
        %367 = vrot.lane.b32.xlu0 %v363, 32
        %v368 = vpop.permute.xlu0 %367
        %369 = vrot.lane.b32.xlu0 %v364, 32
        %v370 = vpop.permute.xlu0 %369
        %371 = vrot.lane.b32.xlu0 %v365, 32
        %v372 = vpop.permute.xlu0 %371
        %373 = vrot.lane.b32.xlu0 %v366, 32
        %v374 = vpop.permute.xlu0 %373
        %vm375 = vcmask 261120
        %v378 = vsel %vm375, %v351, %v368
        %v381 = vsel %vm375, %v352, %v370
        %v384 = vsel %vm375, %v353, %v372
        %v387 = vsel %vm375, %v354, %v374
        %v388 = vld [vmem:[%s1] sm:$0xf]
        %v389 = vld [vmem:[%s1 + $0x4] sm:$0xf]
        %v390 = vld [vmem:[%s1 + $0x8] sm:$0xf]
        %v391 = vld [vmem:[%s1 + $0xc] sm:$0xf]
        %v392 = vld [vmem:[%s1 + $0x10] sm:$0xf]
        %v393 = vld [vmem:[%s1 + $0x14] sm:$0xf]
        %v394 = vld [vmem:[%s1 + $0x18] sm:$0xf]
        %v395 = vld [vmem:[%s1 + $0x1c] sm:$0xf]
        %v396 = vld [vmem:[%s2] sm:$0x1]
        %v398 = vlaneseq
        %v399 = vshrl.u32 %v398, 7
        %v400 = vsub.s32 0, %v399
        %v401 = vrot.slane %v396, %v400
        %v411 = vunpack.c.l.b16 %v388
        %v412 = vunpack.c.l.b16 %v389
        %v413 = vunpack.c.l.b16 %v390
        %v414 = vunpack.c.l.b16 %v391
        %v415 = vunpack.c.l.b16 %v392
        %v416 = vunpack.c.l.b16 %v393
        %v417 = vunpack.c.l.b16 %v394
        %v418 = vunpack.c.l.b16 %v395
        %v419 = vpack.c.b16 %v412, %v411
        %v420 = vpack.c.b16 %v414, %v413
        %v421 = vpack.c.b16 %v416, %v415
        %v422 = vpack.c.b16 %v418, %v417
        %vm427 = vcmask 523264
        %v428 = vsel %vm427, %v378, 0
        %v430 = vsel %vm427, %v381, 0
        %v432 = vsel %vm427, %v384, 0
        %v434 = vsel %vm427, %v387, 0
        %436 = vmatprep.subr.bf16.mxu0 0
        %437 = vmatpush1.bf16.msra.mxu0 %v419
        %438 = vmatprep.subr.bf16.mxu0 0
        %439 = vmatpush1.bf16.msra.mxu0 %v420
        %440 = vmatprep.subr.bf16.mxu0 0
        %441 = vmatpush1.bf16.msra.mxu0 %v421
        %442 = vmatprep.subr.bf16.mxu0 0
        %443 = vmatpush1.bf16.msra.mxu0 %v422
        %444 = vmatprep.subr.bf16.mxu0 0
        %445 = vmatpush1.bf16.msra.mxu0 0
        %446 = vmatprep.subr.bf16.mxu0 0
        %447 = vmatpush1.bf16.msra.mxu0 0
        %448 = vmatprep.subr.bf16.mxu0 0
        %449 = vmatpush1.bf16.msra.mxu0 0
        %450 = vmatprep.subr.bf16.mxu0 0
        %451 = vmatpush1.bf16.msra.mxu0 0
        %452 = vmatprep.subr.bf16.mxu0 0
        %453 = vmatpush1.bf16.msra.mxu0 0
        %454 = vmatprep.subr.bf16.mxu0 0
        %455 = vmatpush1.bf16.msra.mxu0 0
        %456 = vmatprep.subr.bf16.mxu0 0
        %457 = vmatpush1.bf16.msra.mxu0 0
        %458 = vmatprep.subr.bf16.mxu0 0
        %459 = vmatpush1.bf16.msra.mxu0 0
        %460 = vmatprep.subr.bf16.mxu0 0
        %461 = vmatpush1.bf16.msra.mxu0 0
        %462 = vmatprep.subr.bf16.mxu0 0
        %463 = vmatpush1.bf16.msra.mxu0 0
        %464 = vmatprep.subr.bf16.mxu0 0
        %465 = vmatpush1.bf16.msra.mxu0 0
        %466 = vmatprep.subr.bf16.mxu0 0
        %467 = vmatpush1.bf16.msra.mxu0 0
        %468 = vmatprep.mubr.bf16.mxu0 0
        %469 = vmatmul.mubr.bf16.gmra.mrb[0].mxu0 %v428
        %v470 = vpop.f32.mrb[0].mxu0
        %v471 = vadd.f32 %v401, %v470
        %v472 = vpop.f32.mrb[0].mxu0
        %v473 = vpop.f32.mrb[0].mxu0
        %v474 = vadd.f32 %v401, %v473
        %v475 = vpop.f32.mrb[0].mxu0
        %476 = vmatprep.mubr.bf16.mxu0 0
        %477 = vmatmul.mubr.bf16.gmra.mrb[0].mxu0 %v430
        %v478 = vpop.f32.mrb[0].mxu0
        %v479 = vadd.f32 %v401, %v478
        %v480 = vpop.f32.mrb[0].mxu0
        %v481 = vpop.f32.mrb[0].mxu0
        %v482 = vadd.f32 %v401, %v481
        %v483 = vpop.f32.mrb[0].mxu0
        %484 = vmatprep.mubr.bf16.mxu0 0
        %485 = vmatmul.mubr.bf16.gmra.mrb[0].mxu0 %v432
        %v486 = vpop.f32.mrb[0].mxu0
        %v487 = vadd.f32 %v401, %v486
        %v488 = vpop.f32.mrb[0].mxu0
        %v489 = vpop.f32.mrb[0].mxu0
        %v490 = vadd.f32 %v401, %v489
        %v491 = vpop.f32.mrb[0].mxu0
        %492 = vmatprep.mubr.bf16.mxu0 0
        %493 = vmatmul.mubr.bf16.gmra.mrb[0].mxu0 %v434
        %v494 = vpop.f32.mrb[0].mxu0
        %v495 = vadd.f32 %v401, %v494
        %v496 = vpop.f32.mrb[0].mxu0
        %v497 = vpop.f32.mrb[0].mxu0
        %v498 = vadd.f32 %v401, %v497
        %v499 = vpop.f32.mrb[0].mxu0
        %500 = vdwg.mxu0
        %vm501 = vcmask 64512
        %502 = vst.msk [vmem:[%s190] sm:$0xff] %vm501, %v471
        %503 = vst.msk [vmem:[%s190 + $0x8] sm:$0xff] %vm501, %v474
        %504 = vst.msk [vmem:[%s190 + $0x10] sm:$0xff] %vm501, %v479
        %505 = vst.msk [vmem:[%s190 + $0x18] sm:$0xff] %vm501, %v482
        %506 = vst.msk [vmem:[%s190 + $0x20] sm:$0xff] %vm501, %v487
        %507 = vst.msk [vmem:[%s190 + $0x28] sm:$0xff] %vm501, %v490
        %508 = vst.msk [vmem:[%s190 + $0x30] sm:$0xff] %vm501, %v495
        %509 = vst.msk [vmem:[%s190 + $0x38] sm:$0xff] %vm501, %v498
        %s510 = sand.u32 %s109, 1
        %s511 = scalar_lea.sflag [#allocation3], %s510
        %s512 = sand.u32 %s109, 1
        %s513 = smul.addr %s512, 64
        %s514 = scalar_lea.vmem [#allocation2], %s513
        // Predicated region
        $region33: #{tpu_custom_call.1} parent=31 // pred_check
          %p515 = pneg %p119
        $region34: #{tpu_custom_call.1} parent=31 // pred_check_branch
          %517 = sbr.rel (%p515) target = $region36
        $region35: #{tpu_custom_call.1} parent=31 // pred_region
          %s518 = smul.u32 8, %s22
          %s520 = ssub.s32 1024, 1024
          %521 = vsyncadd %s511, %s520
          %s522 = smul.addr %s21, 8
          %s523 = sadd.s32 %s518, %s522
          %s524 = smul.addr %s523, 128
          %s525 = scalar_lea.hbm %s3, %s524
          %s526 = sshll.u32 %s514, 4
          %s527 = int_to_ptr.vmem [resolvable:$true] %s526
          %532 = dma.vmem_to_hbm [thread:$0]  %s527, 1024, %s525, %s511, 128, 128, 8
        $region36: #{tpu_custom_call.1} parent=31 // pred_fallthru
          _
      $region32: #{tpu_custom_call.1} parent=5 // pred_fallthru
        _
      %p533 = scmp.le.s32.totalorder 2, %s12
      // Predicated region
      $region37: #{tpu_custom_call.1} parent=5 // pred_check
        %p534 = pneg %p533
      $region38: #{tpu_custom_call.1} parent=5 // pred_check_branch
        %536 = sbr.rel (%p534) target = $region40
      $region39: #{tpu_custom_call.1} parent=5 // pred_region
        %s537 = ssub.s32 %s12, 2
        // Predicated region
        $region41: #{tpu_custom_call.1} parent=39 // pred_check
          %p538 = pneg %p125
        $region42: #{tpu_custom_call.1} parent=39 // pred_check_branch
          %540 = sbr.rel (%p538) target = $region44
        $region43: #{tpu_custom_call.1} parent=39 // pred_region
          %s541 = sand.u32 %s110, 1
          %s542 = scalar_lea.sflag [#allocation3], %s541
          %s543 = sand.u32 %s110, 1
          %s544 = smul.addr %s543, 64
          %s545 = scalar_lea.vmem [#allocation2], %s544
          %546 = dma.done %s542, 1024
        $region44: #{tpu_custom_call.1} parent=39 // pred_fallthru
          _
      $region40: #{tpu_custom_call.1} parent=5 // pred_fallthru
        _
    $region6: #{tpu_custom_call.1} parent=1 // loop_footer
      %s16 = sadd.s32 1, %s12
    $region7: #{tpu_custom_call.1} parent=1 // loop_footer_branch
      %11 = sbr.rel target = $region3
    $region8: #{tpu_custom_call.1} parent=1 // loop_exit
      _
    %547 = vsyncpa [#allocation3], 1
    %s548 = scalar_lea.sflag [#allocation3], 1
    %549 = vsyncpa %s548, 1

// kernel: tpu_custom_call.1
$region0: #{tpu_custom_call.1}
  #allocation0 [shape = 'u32[]', space=smem, size = 0x4, offset = 0x4, fixed_abs, tag = 'smem constant byte address 0x4 - core index']
  #allocation1 [shape = 'u32[144,128]{1,0:T(1,128)}', space=vmem, size = 0x12000, scoped, tag = 'internal scratch']
  %s0 = inlined_call_operand.vmem [shape: bf16[2,8,9,32], index: 0, kind: input, shape index: {}]
  %s1 = inlined_call_operand.vmem [shape: bf16[64,8], index: 1, kind: input, shape index: {}]
  %s2 = inlined_call_operand.vmem [shape: f32[1,8], index: 2, kind: input, shape index: {}]
  %s3 = inlined_call_operand.hbm [shape: f32[2,8,8,8], index: 3, kind: output, shape index: {}]
  %s4 = sld [smem:[#allocation0]]
  $region45: #{tpu_custom_call.1} parent=0
    _
  %s6 = ssub.s32 1, %s4
  %s7 = scalar_select 0, %s6, %s4
  $region1: #{tpu_custom_call.1} parent=0
    #allocation2 [shape = 'u8[65536]{0}', space=vmem, size = 0x10000, scoped, tag = 'output window, operand 0']
    #allocation3 [shape = 's32[2]{0}', space=sflag, size = 0x8, scoped, tag = 'scoped memory for tpu_custom_call.1']
    %8 = vsyncpa [#allocation3], 0
    %s9 = scalar_lea.sflag [#allocation3], 1
    %10 = vsyncpa %s9, 0
    loop: start=0, step=1, limit=4
    $region2: #{tpu_custom_call.1} parent=1 // loop_pre_header
      _
    $region3: #{tpu_custom_call.1} parent=1 // loop_header
      %s12 = sphi 0, %s16
      %p13 = scmp.ge.s32.totalorder %s12, 4
      %s19 = sphi 0, %s31
      %s20 = sphi 0, %s27
      %s21 = sphi 0, %s19
      %s22 = sphi 0, %s20
      %s23 = sphi 0, %s21
      %s24 = sphi 0, %s22
      %s36 = sphi 0, %s38
      %s39 = sphi 0, %s36
      %s40 = sphi 0, %s39
      %s56 = sphi 0, %s40
      %s60 = sphi 0, %s60
      %s62 = sphi 0, %s60
      %s63 = sphi 0, %s62
      %s77 = sphi 0, %s63
      %s81 = sphi 0, %s81
      %s83 = sphi 0, %s81
      %s84 = sphi 0, %s83
      %s98 = sphi 0, %s84
      %s106 = sphi 0, %s108
      %s109 = sphi 0, %s106
      %s110 = sphi 0, %s109
      %s126 = sphi 0, %s110
    $region4: #{tpu_custom_call.1} parent=1 // loop_header_branch
      %15 = sbr.rel (%p13) target = $region8
    $region5: #{tpu_custom_call.1} parent=1 // loop_body
      %s17 = ssub.s32 %s12, 1
      %s18 = ssub.s32 %s12, 2
      %s25 = sadd.s32 1, %s20
      %p26 = scmp.ge.s32.totalorder %s25, 1
      %s27 = scalar_select %p26, 0, %s25
      %s28 = sadd.s32 1, %s19
      %s29 = scalar_select %p26, %s28, %s19
      %p30 = scmp.ge.s32.totalorder %s29, 2
      %s31 = scalar_select %p30, 0, %s29
      %s32 = ssub.s32 %s19, %s31
      %s33 = ssub.s32 %s20, %s27
      %s34 = sor.u32 %s32, %s33
      %p35 = scmp.eq.s32.totalorder %s34, 0
      %s37 = sadd.s32 %s36, 1
      %s38 = scalar_select %p35, %s36, %s37
      %p41 = pneg %p35
      %p42 = scmp.eq.s32.totalorder %s12, 1
      %p43 = por %p41, %p42
      %p44 = scmp.ne.s32.totalorder %s36, %s39
      %p45 = scmp.eq.s32.totalorder %s12, 0
      %p46 = por %p44, %p45
      %p47 = scmp.ne.s32.totalorder %s36, %s39
      %p48 = scmp.eq.s32.totalorder %s17, 1
      %p49 = por %p47, %p48
      %p50 = scmp.ne.s32.totalorder %s39, %s40
      %p51 = scmp.eq.s32.totalorder %s17, 0
      %p52 = por %p50, %p51
      %p53 = scmp.ne.s32.totalorder %s39, %s40
      %p54 = scmp.eq.s32.totalorder %s18, 1
      %p55 = por %p53, %p54
      %p57 = scmp.ne.s32.totalorder %s40, %s56
      %p58 = scmp.eq.s32.totalorder %s18, 0
      %p59 = por %p57, %p58
      %s61 = sadd.s32 %s60, 1
      %p64 = scmp.eq.s32.totalorder %s12, 1
      %p65 = scmp.ne.s32.totalorder %s60, %s62
      %p66 = scmp.eq.s32.totalorder %s12, 0
      %p67 = por %p65, %p66
      %p68 = scmp.ne.s32.totalorder %s60, %s62
      %p69 = scmp.eq.s32.totalorder %s17, 1
      %p70 = por %p68, %p69
      %p71 = scmp.ne.s32.totalorder %s62, %s63
      %p72 = scmp.eq.s32.totalorder %s17, 0
      %p73 = por %p71, %p72
      %p74 = scmp.ne.s32.totalorder %s62, %s63
      %p75 = scmp.eq.s32.totalorder %s18, 1
      %p76 = por %p74, %p75
      %p78 = scmp.ne.s32.totalorder %s63, %s77
      %p79 = scmp.eq.s32.totalorder %s18, 0
      %p80 = por %p78, %p79
      %s82 = sadd.s32 %s81, 1
      %p85 = scmp.eq.s32.totalorder %s12, 1
      %p86 = scmp.ne.s32.totalorder %s81, %s83
      %p87 = scmp.eq.s32.totalorder %s12, 0
      %p88 = por %p86, %p87
      %p89 = scmp.ne.s32.totalorder %s81, %s83
      %p90 = scmp.eq.s32.totalorder %s17, 1
      %p91 = por %p89, %p90
      %p92 = scmp.ne.s32.totalorder %s83, %s84
      %p93 = scmp.eq.s32.totalorder %s17, 0
      %p94 = por %p92, %p93
      %p95 = scmp.ne.s32.totalorder %s83, %s84
      %p96 = scmp.eq.s32.totalorder %s18, 1
      %p97 = por %p95, %p96
      %p99 = scmp.ne.s32.totalorder %s84, %s98
      %p100 = scmp.eq.s32.totalorder %s18, 0
      %p101 = por %p99, %p100
      %s102 = ssub.s32 %s19, %s31
      %s103 = ssub.s32 %s20, %s27
      %s104 = sor.u32 %s102, %s103
      %p105 = scmp.eq.s32.totalorder %s104, 0
      %s107 = sadd.s32 %s106, 1
      %s108 = scalar_select %p105, %s106, %s107
      %p111 = pneg %p105
      %p112 = scmp.eq.s32.totalorder %s12, 1
      %p113 = por %p111, %p112
      %p114 = scmp.ne.s32.totalorder %s106, %s109
      %p115 = scmp.eq.s32.totalorder %s12, 0
      %p116 = por %p114, %p115
      %p117 = scmp.ne.s32.totalorder %s106, %s109
      %p118 = scmp.eq.s32.totalorder %s17, 1
      %p119 = por %p117, %p118
      %p120 = scmp.ne.s32.totalorder %s109, %s110
      %p121 = scmp.eq.s32.totalorder %s17, 0
      %p122 = por %p120, %p121
      %p123 = scmp.ne.s32.totalorder %s109, %s110
      %p124 = scmp.eq.s32.totalorder %s18, 1
      %p125 = por %p123, %p124
      %p127 = scmp.ne.s32.totalorder %s110, %s126
      %p128 = scmp.eq.s32.totalorder %s18, 0
      %p129 = por %p127, %p128
      %p130 = scmp.le.s32.totalorder 1, %s12
      %p131 = scmp.lt.s32.totalorder %s12, 3
      %p132 = pnand %p130, %p131
      %p133 = pneg %p132
      // Predicated region
      $region9: #{tpu_custom_call.1} parent=5 // pred_check
        _
      $region10: #{tpu_custom_call.1} parent=5 // pred_check_branch
        %135 = sbr.rel (%p132) target = $region12
      $region11: #{tpu_custom_call.1} parent=5 // pred_region
        %s136 = ssub.s32 %s12, 1
        // Predicated region
        $region13: #{tpu_custom_call.1} parent=11 // pred_check
          %p137 = pneg %p73
        $region14: #{tpu_custom_call.1} parent=11 // pred_check_branch
          %139 = sbr.rel (%p137) target = $region16
        $region15: #{tpu_custom_call.1} parent=11 // pred_region
          _
        $region16: #{tpu_custom_call.1} parent=11 // pred_fallthru
          _
        // Predicated region
        $region17: #{tpu_custom_call.1} parent=11 // pred_check
          %p140 = pneg %p94
        $region18: #{tpu_custom_call.1} parent=11 // pred_check_branch
          %142 = sbr.rel (%p140) target = $region20
        $region19: #{tpu_custom_call.1} parent=11 // pred_region
          _
        $region20: #{tpu_custom_call.1} parent=11 // pred_fallthru
          _
      $region12: #{tpu_custom_call.1} parent=5 // pred_fallthru
        _
      %p143 = scmp.lt.s32.totalorder %s12, 2
      // Predicated region
      $region21: #{tpu_custom_call.1} parent=5 // pred_check
        %p144 = pneg %p143
      $region22: #{tpu_custom_call.1} parent=5 // pred_check_branch
        %146 = sbr.rel (%p144) target = $region24
      $region23: #{tpu_custom_call.1} parent=5 // pred_region
        // Predicated region
        $region25: #{tpu_custom_call.1} parent=23 // pred_check
          %p147 = pneg %p46
        $region26: #{tpu_custom_call.1} parent=23 // pred_check_branch
          %149 = sbr.rel (%p147) target = $region28
        $region27: #{tpu_custom_call.1} parent=23 // pred_region
          %s150 = smul.u32 8, %s20
          %p151 = scmp.lt.s32.totalorder %s19, 1
          %s152 = scalar_select %p151, %s19, 1
          %p153 = scmp.lt.s32.totalorder %s150, 7
          %s154 = scalar_select %p153, %s150, 7
          %s155 = smul.addr %s154, 2
          %s156 = smul.addr %s152, 16
          %s157 = sadd.s32 %s155, %s156
          %s158 = smul.addr %s157, 4
          %s159 = scalar_lea.vmem %s0, %s158
          %s160 = smul.u32 8, %s20
        $region28: #{tpu_custom_call.1} parent=23 // pred_fallthru
          _
      $region24: #{tpu_custom_call.1} parent=5 // pred_fallthru
        _
      %p161 = scmp.le.s32.totalorder 1, %s12
      %p162 = scmp.lt.s32.totalorder %s12, 3
      %p163 = pnand %p161, %p162
      %p164 = pneg %p163
      // Predicated region
      $region29: #{tpu_custom_call.1} parent=5 // pred_check
        _
      $region30: #{tpu_custom_call.1} parent=5 // pred_check_branch
        %166 = sbr.rel (%p163) target = $region32
      $region31: #{tpu_custom_call.1} parent=5 // pred_region
        %s167 = ssub.s32 %s12, 1
        %s168 = smul.u32 8, %s22
        %p169 = scmp.lt.s32.totalorder %s21, 1
        %s170 = scalar_select %p169, %s21, 1
        %p171 = scmp.lt.s32.totalorder %s168, 7
        %s172 = scalar_select %p171, %s168, 7
        %s173 = smul.addr %s172, 2
        %s174 = smul.addr %s170, 16
        %s175 = sadd.s32 %s173, %s174
        %s176 = smul.addr %s175, 4
        %s177 = scalar_lea.vmem %s0, %s176
        %p178 = pneg %p52
        %p179 = pneg %p49
        %p180 = pneg %p73
        %p181 = pneg %p70
        %p182 = pneg %p94
        %p183 = pneg %p91
        %p184 = pneg %p122
        %p185 = pneg %p119
        %s186 = sand.u32 %s109, 1
        %s187 = scalar_lea.sflag [#allocation3], %s186
        %s188 = sand.u32 %s109, 1
        %s189 = smul.addr %s188, 64
        %s190 = scalar_lea.vmem [#allocation2], %s189
        %s191 = smul.u32 8, %s22
        %p192 = scmp.lt.s32.totalorder %s21, 1
        %s193 = scalar_select %p192, %s21, 1
        %p194 = scmp.lt.s32.totalorder %s191, 7
        %s195 = scalar_select %p194, %s191, 7
        %s196 = smul.addr %s195, 2
        %s197 = smul.addr %s193, 16
        %s198 = sadd.s32 %s196, %s197
        %s199 = smul.addr %s198, 4
        %s200 = scalar_lea.vmem %s0, %s199
        %s201 = smul.u32 8, %s22
        %s202 = smul.u32 8, %s22
        %v204 = vld [vmem:[%s200] sm:$0xf]
        %v205 = vld [vmem:[%s200 + $0x8] sm:$0xf]
        %v206 = vld [vmem:[%s200 + $0x10] sm:$0xf]
        %v207 = vld [vmem:[%s200 + $0x18] sm:$0xf]
        %v208 = vld [vmem:[%s200 + $0x20] sm:$0xf]
        %v209 = vld [vmem:[%s200 + $0x28] sm:$0xf]
        %v210 = vld [vmem:[%s200 + $0x30] sm:$0xf]
        %v211 = vld [vmem:[%s200 + $0x38] sm:$0xf]
        %v212 = vld [vmem:[%s200 + $0x4] sm:$0x1]
        %v213 = vld [vmem:[%s200 + $0xc] sm:$0x1]
        %v214 = vld [vmem:[%s200 + $0x14] sm:$0x1]
        %v215 = vld [vmem:[%s200 + $0x1c] sm:$0x1]
        %v216 = vld [vmem:[%s200 + $0x24] sm:$0x1]
        %v217 = vld [vmem:[%s200 + $0x2c] sm:$0x1]
        %v218 = vld [vmem:[%s200 + $0x34] sm:$0x1]
        %v219 = vld [vmem:[%s200 + $0x3c] sm:$0x1]
        %vm220 = vsmask.f32 3328
        %vm221 = vsmask.f32 7440
        %vm222 = vmor %vm220, %vm221
        %v224 = vshrl.u32 %v204, 16
        %v226 = vrot.slane %v224, 4
        %v227 = vshll.u32 %v204, 16
        %v229 = vrot.slane %v227, 5
        %v230 = vor.u32 %v226, %v229
        %v231 = vrot.slane %v230, 4
        %v233 = vshll.u32 %v212, 16
        %v235 = vrot.slane %v233, 5
        %v236 = vsel %vm222, %v231, %v235
        %v238 = vshrl.u32 %v205, 16
        %v240 = vrot.slane %v238, 4
        %v241 = vshll.u32 %v205, 16
        %v243 = vrot.slane %v241, 5
        %v244 = vor.u32 %v240, %v243
        %v245 = vrot.slane %v244, 4
        %v247 = vshll.u32 %v213, 16
        %v249 = vrot.slane %v247, 5
        %v250 = vsel %vm222, %v245, %v249
        %v252 = vshrl.u32 %v206, 16
        %v254 = vrot.slane %v252, 4
        %v255 = vshll.u32 %v206, 16
        %v257 = vrot.slane %v255, 5
        %v258 = vor.u32 %v254, %v257
        %v259 = vrot.slane %v258, 4
        %v261 = vshll.u32 %v214, 16
        %v263 = vrot.slane %v261, 5
        %v264 = vsel %vm222, %v259, %v263
        %v266 = vshrl.u32 %v207, 16
        %v268 = vrot.slane %v266, 4
        %v269 = vshll.u32 %v207, 16
        %v271 = vrot.slane %v269, 5
        %v272 = vor.u32 %v268, %v271
        %v273 = vrot.slane %v272, 4
        %v275 = vshll.u32 %v215, 16
        %v277 = vrot.slane %v275, 5
        %v278 = vsel %vm222, %v273, %v277
        %v280 = vshrl.u32 %v208, 16
        %v282 = vrot.slane %v280, 4
        %v283 = vshll.u32 %v208, 16
        %v285 = vrot.slane %v283, 5
        %v286 = vor.u32 %v282, %v285
        %v287 = vrot.slane %v286, 4
        %v289 = vshll.u32 %v216, 16
        %v291 = vrot.slane %v289, 5
        %v292 = vsel %vm222, %v287, %v291
        %v294 = vshrl.u32 %v209, 16
        %v296 = vrot.slane %v294, 4
        %v297 = vshll.u32 %v209, 16
        %v299 = vrot.slane %v297, 5
        %v300 = vor.u32 %v296, %v299
        %v301 = vrot.slane %v300, 4
        %v303 = vshll.u32 %v217, 16
        %v305 = vrot.slane %v303, 5
        %v306 = vsel %vm222, %v301, %v305
        %v308 = vshrl.u32 %v210, 16
        %v310 = vrot.slane %v308, 4
        %v311 = vshll.u32 %v210, 16
        %v313 = vrot.slane %v311, 5
        %v314 = vor.u32 %v310, %v313
        %v315 = vrot.slane %v314, 4
        %v317 = vshll.u32 %v218, 16
        %v319 = vrot.slane %v317, 5
        %v320 = vsel %vm222, %v315, %v319
        %v322 = vshrl.u32 %v211, 16
        %v324 = vrot.slane %v322, 4
        %v325 = vshll.u32 %v211, 16
        %v327 = vrot.slane %v325, 5
        %v328 = vor.u32 %v324, %v327
        %v329 = vrot.slane %v328, 4
        %v331 = vshll.u32 %v219, 16
        %v333 = vrot.slane %v331, 5
        %v334 = vsel %vm222, %v329, %v333
        %v343 = vunpack.c.l.b16 %v204
        %v344 = vunpack.c.l.b16 %v205
        %v345 = vunpack.c.l.b16 %v206
        %v346 = vunpack.c.l.b16 %v207
        %v347 = vunpack.c.l.b16 %v208
        %v348 = vunpack.c.l.b16 %v209
        %v349 = vunpack.c.l.b16 %v210
        %v350 = vunpack.c.l.b16 %v211
        %v351 = vpack.c.b16 %v344, %v343
        %v352 = vpack.c.b16 %v346, %v345
        %v353 = vpack.c.b16 %v348, %v347
        %v354 = vpack.c.b16 %v350, %v349
        %v355 = vunpack.c.l.b16 %v236
        %v356 = vunpack.c.l.b16 %v250
        %v357 = vunpack.c.l.b16 %v264
        %v358 = vunpack.c.l.b16 %v278
        %v359 = vunpack.c.l.b16 %v292
        %v360 = vunpack.c.l.b16 %v306
        %v361 = vunpack.c.l.b16 %v320
        %v362 = vunpack.c.l.b16 %v334
        %v363 = vpack.c.b16 %v356, %v355
        %v364 = vpack.c.b16 %v358, %v357
        %v365 = vpack.c.b16 %v360, %v359
        %v366 = vpack.c.b16 %v362, %v361
        %367 = vrot.lane.b32.xlu0 %v363, 32
        %v368 = vpop.permute.xlu0 %367
        %369 = vrot.lane.b32.xlu0 %v364, 32
        %v370 = vpop.permute.xlu0 %369
        %371 = vrot.lane.b32.xlu0 %v365, 32
        %v372 = vpop.permute.xlu0 %371
        %373 = vrot.lane.b32.xlu0 %v366, 32
        %v374 = vpop.permute.xlu0 %373
        %vm375 = vcmask 261120
        %v378 = vsel %vm375, %v351, %v368
        %v381 = vsel %vm375, %v352, %v370
        %v384 = vsel %vm375, %v353, %v372
        %v387 = vsel %vm375, %v354, %v374
        %v388 = vld [vmem:[%s1] sm:$0xf]
        %v389 = vld [vmem:[%s1 + $0x4] sm:$0xf]
        %v390 = vld [vmem:[%s1 + $0x8] sm:$0xf]
        %v391 = vld [vmem:[%s1 + $0xc] sm:$0xf]
        %v392 = vld [vmem:[%s1 + $0x10] sm:$0xf]
        %v393 = vld [vmem:[%s1 + $0x14] sm:$0xf]
        %v394 = vld [vmem:[%s1 + $0x18] sm:$0xf]
        %v395 = vld [vmem:[%s1 + $0x1c] sm:$0xf]
        %v396 = vld [vmem:[%s2] sm:$0x1]
        %v398 = vlaneseq
        %v399 = vshrl.u32 %v398, 7
        %v400 = vsub.s32 0, %v399
        %v401 = vrot.slane %v396, %v400
        %v411 = vunpack.c.l.b16 %v388
        %v412 = vunpack.c.l.b16 %v389
        %v413 = vunpack.c.l.b16 %v390
        %v414 = vunpack.c.l.b16 %v391
        %v415 = vunpack.c.l.b16 %v392
        %v416 = vunpack.c.l.b16 %v393
        %v417 = vunpack.c.l.b16 %v394
        %v418 = vunpack.c.l.b16 %v395
        %v419 = vpack.c.b16 %v412, %v411
        %v420 = vpack.c.b16 %v414, %v413
        %v421 = vpack.c.b16 %v416, %v415
        %v422 = vpack.c.b16 %v418, %v417
        %vm427 = vcmask 523264
        %v428 = vsel %vm427, %v378, 0
        %v430 = vsel %vm427, %v381, 0
        %v432 = vsel %vm427, %v384, 0
        %v434 = vsel %vm427, %v387, 0
        %436 = vmatprep.subr.bf16.mxu0 0
        %437 = vmatpush1.bf16.msra.mxu0 %v419
        %438 = vmatprep.subr.bf16.mxu0 0
        %439 = vmatpush1.bf16.msra.mxu0 %v420
        %440 = vmatprep.subr.bf16.mxu0 0
        %441 = vmatpush1.bf16.msra.mxu0 %v421
        %442 = vmatprep.subr.bf16.mxu0 0
        %443 = vmatpush1.bf16.msra.mxu0 %v422
        %444 = vmatprep.subr.bf16.mxu0 0
        %445 = vmatpush1.bf16.msra.mxu0 0
        %446 = vmatprep.subr.bf16.mxu0 0
        %447 = vmatpush1.bf16.msra.mxu0 0
        %448 = vmatprep.subr.bf16.mxu0 0
        %449 = vmatpush1.bf16.msra.mxu0 0
        %450 = vmatprep.subr.bf16.mxu0 0
        %451 = vmatpush1.bf16.msra.mxu0 0
        %452 = vmatprep.subr.bf16.mxu0 0
        %453 = vmatpush1.bf16.msra.mxu0 0
        %454 = vmatprep.subr.bf16.mxu0 0
        %455 = vmatpush1.bf16.msra.mxu0 0
        %456 = vmatprep.subr.bf16.mxu0 0
        %457 = vmatpush1.bf16.msra.mxu0 0
        %458 = vmatprep.subr.bf16.mxu0 0
        %459 = vmatpush1.bf16.msra.mxu0 0
        %460 = vmatprep.subr.bf16.mxu0 0
        %461 = vmatpush1.bf16.msra.mxu0 0
        %462 = vmatprep.subr.bf16.mxu0 0
        %463 = vmatpush1.bf16.msra.mxu0 0
        %464 = vmatprep.subr.bf16.mxu0 0
        %465 = vmatpush1.bf16.msra.mxu0 0
        %466 = vmatprep.subr.bf16.mxu0 0
        %467 = vmatpush1.bf16.msra.mxu0 0
        %468 = vmatprep.mubr.bf16.mxu0 0
        %469 = vmatmul.mubr.bf16.gmra.mrb[0].mxu0 %v428
        %v470 = vpop.f32.mrb[0].mxu0
        %v471 = vadd.f32 %v401, %v470
        %v472 = vpop.f32.mrb[0].mxu0
        %v473 = vpop.f32.mrb[0].mxu0
        %v474 = vadd.f32 %v401, %v473
        %v475 = vpop.f32.mrb[0].mxu0
        %476 = vmatprep.mubr.bf16.mxu0 0
        %477 = vmatmul.mubr.bf16.gmra.mrb[0].mxu0 %v430
        %v478 = vpop.f32.mrb[0].mxu0
        %v479 = vadd.f32 %v401, %v478
        %v480 = vpop.f32.mrb[0].mxu0
        %v481 = vpop.f32.mrb[0].mxu0
        %v482 = vadd.f32 %v401, %v481
        %v483 = vpop.f32.mrb[0].mxu0
        %484 = vmatprep.mubr.bf16.mxu0 0
        %485 = vmatmul.mubr.bf16.gmra.mrb[0].mxu0 %v432
        %v486 = vpop.f32.mrb[0].mxu0
        %v487 = vadd.f32 %v401, %v486
        %v488 = vpop.f32.mrb[0].mxu0
        %v489 = vpop.f32.mrb[0].mxu0
        %v490 = vadd.f32 %v401, %v489
        %v491 = vpop.f32.mrb[0].mxu0
        %492 = vmatprep.mubr.bf16.mxu0 0
        %493 = vmatmul.mubr.bf16.gmra.mrb[0].mxu0 %v434
        %v494 = vpop.f32.mrb[0].mxu0
        %v495 = vadd.f32 %v401, %v494
        %v496 = vpop.f32.mrb[0].mxu0
        %v497 = vpop.f32.mrb[0].mxu0
        %v498 = vadd.f32 %v401, %v497
        %v499 = vpop.f32.mrb[0].mxu0
        %500 = vdwg.mxu0
        %vm501 = vcmask 64512
        %502 = vst.msk [vmem:[%s190] sm:$0xff] %vm501, %v471
        %503 = vst.msk [vmem:[%s190 + $0x8] sm:$0xff] %vm501, %v474
        %504 = vst.msk [vmem:[%s190 + $0x10] sm:$0xff] %vm501, %v479
        %505 = vst.msk [vmem:[%s190 + $0x18] sm:$0xff] %vm501, %v482
        %506 = vst.msk [vmem:[%s190 + $0x20] sm:$0xff] %vm501, %v487
        %507 = vst.msk [vmem:[%s190 + $0x28] sm:$0xff] %vm501, %v490
        %508 = vst.msk [vmem:[%s190 + $0x30] sm:$0xff] %vm501, %v495
        %509 = vst.msk [vmem:[%s190 + $0x38] sm:$0xff] %vm501, %v498
        %s510 = sand.u32 %s109, 1
        %s511 = scalar_lea.sflag [#allocation3], %s510
        %s512 = sand.u32 %s109, 1
        %s513 = smul.addr %s512, 64
        %s514 = scalar_lea.vmem [#allocation2], %s513
        // Predicated region
        $region33: #{tpu_custom_call.1} parent=31 // pred_check
          %p515 = pneg %p119
        $region34: #{tpu_custom_call.1} parent=31 // pred_check_branch
          %517 = sbr.rel (%p515) target = $region36
        $region35: #{tpu_custom_call.1} parent=31 // pred_region
          %s518 = smul.u32 8, %s22
          %s520 = ssub.s32 1024, 1024
          %521 = vsyncadd %s511, %s520
          %s522 = smul.addr %s21, 8
          %s523 = sadd.s32 %s518, %s522
          %s524 = smul.addr %s523, 128
          %s525 = scalar_lea.hbm %s3, %s524
          %s526 = sshll.u32 %s514, 4
          %s527 = int_to_ptr.vmem [resolvable:$true] %s526
          %532 = dma.vmem_to_hbm [thread:$0]  %s527, 1024, %s525, %s511, 128, 128, 8
        $region36: #{tpu_custom_call.1} parent=31 // pred_fallthru
          _
      $region32: #{tpu_custom_call.1} parent=5 // pred_fallthru
        _
      %p533 = scmp.le.s32.totalorder 2, %s12
      // Predicated region
      $region37: #{tpu_custom_call.1} parent=5 // pred_check
        %p534 = pneg %p533
      $region38: #{tpu_custom_call.1} parent=5 // pred_check_branch
        %536 = sbr.rel (%p534) target = $region40
      $region39: #{tpu_custom_call.1} parent=5 // pred_region
        %s537 = ssub.s32 %s12, 2
        // Predicated region
        $region41: #{tpu_custom_call.1} parent=39 // pred_check
          %p538 = pneg %p125
        $region42: #{tpu_custom_call.1} parent=39 // pred_check_branch
          %540 = sbr.rel (%p538) target = $region44
        $region43: #{tpu_custom_call.1} parent=39 // pred_region
          %s541 = sand.u32 %s110, 1
          %s542 = scalar_lea.sflag [#allocation3], %s541
          %s543 = sand.u32 %s110, 1
          %s544 = smul.addr %s543, 64
          %s545 = scalar_lea.vmem [#allocation2], %s544
          %546 = dma.done %s542, 1024
        $region44: #{tpu_custom_call.1} parent=39 // pred_fallthru
          _
      $region40: #{tpu_custom_call.1} parent=5 // pred_fallthru
        _
    $region6: #{tpu_custom_call.1} parent=1 // loop_footer
      %s16 = sadd.s32 1, %s12
    $region7: #{tpu_custom_call.1} parent=1 // loop_footer_branch
      %11 = sbr.rel target = $region3
    $region8: #{tpu_custom_call.1} parent=1 // loop_exit
      _
    %547 = vsyncpa [#allocation3], 1
    %s548 = scalar_lea.sflag [#allocation3], 1
    %549 = vsyncpa %s548, 1

</llo_original>
